<compile_context>
chip_gen: v5e
topology: v5e:2x2
jax: 0.10.0
libtpu: 0.0.40
codegen_flags: <defaults>
</compile_context>

<pallas_src>
import jax
import jax.numpy as jnp
from jax.experimental import pallas as pl
from jax.experimental.pallas import tpu as pltpu

HIDDEN = 100                    # logical hidden width (torch.nn.Linear(input_size, 100))
LANE = 128                      # TPU lane width; hidden contraction dims padded to this
MAX_TM = 1024                   # max batch-tile rows per grid step (amortizes step overhead)
VMEM_BUDGET = 32 * 1024 * 1024  # scoped VMEM budget (safe on v7x's 64 MiB core)


def _round_up(v, m):
    return (v + m - 1) // m * m


def _cdiv(a, b):
    return -(-a // b)


def mlp_kernel(x_ref, w1_ref, b1_ref, w2_ref, b2_ref, w3_ref, b3_ref, o_ref):
    # Layer 1: Linear + ReLU. x arrives in its native f32 (TM, K) layout; cast to
    # bf16 on-core for the MXU (fp32 accumulation via preferred_element_type).
    x = x_ref[...].astype(jnp.bfloat16)
    h = jnp.dot(x, w1_ref[...], preferred_element_type=jnp.float32)
    h = jnp.maximum(h + b1_ref[...], 0.0)
    # Layer 2: Linear + ReLU (re-cast to bf16 to keep the MXU on the bf16 path and
    # halve vreg pressure between back-to-back dots).
    h = jnp.dot(h.astype(jnp.bfloat16), w2_ref[...], preferred_element_type=jnp.float32)
    h = jnp.maximum(h + b2_ref[...], 0.0)
    # Layer 3: Linear (no activation), written at the logical output width.
    y = jnp.dot(h.astype(jnp.bfloat16), w3_ref[...], preferred_element_type=jnp.float32)
    o_ref[...] = (y + b3_ref[...]).astype(o_ref.dtype)


@jax.jit
def network_forward(x, params):
    """Pallas forward pass. x: (B, input_size) f32 -> (B, output_size) f32."""
    w1, b1, w2, b2, w3, b3 = params
    B, K = x.shape
    H = w1.shape[1]
    N = w3.shape[1]
    H_pad = _round_up(H, LANE)   # 100 -> 128: clean 128-lane contraction for dots 2 & 3

    # ---- batch-tile selection (VMEM-accurate) --------------------------------
    # Pallas double-buffers EVERY input, including the constant-index weight/bias
    # specs, and Mosaic needs scratch for the (TM, H_pad) intermediates between dots.
    weight_bytes = 2 * (2 * (K * H_pad + H_pad * H_pad + H_pad * N)    # bf16 weights
                        + 4 * (2 * H_pad + N))                         # f32 biases

    def vmem_bytes(tm):
        streams = 2 * tm * (K + N) * 4          # double-buffered f32 x / out tiles
        scratch = 3 * tm * H_pad * 4            # inter-dot fp32/bf16 intermediates
        return streams + scratch + weight_bytes

    tm_cap = MAX_TM
    while tm_cap > 8 and vmem_bytes(tm_cap) > VMEM_BUDGET:
        tm_cap //= 2

    # Pick tile count first, then an 8-aligned tile, so batch padding is < 8 rows
    # per tile instead of up to a full tile.
    num_tiles = max(1, _cdiv(B, tm_cap))
    TM = max(8, _round_up(_cdiv(B, num_tiles), 8))
    B_pad = num_tiles * TM

    # ---- operand preparation --------------------------------------------------
    # x keeps its native (B, K) f32 layout: no K padding / bf16 cast HBM round trip.
    # Batch padded only when needed (zero extra pass when TM divides B).
    xp = x if B_pad == B else jnp.pad(x, ((0, B_pad - B), (0, 0)))

    def pad2(a, rows, cols, dtype):
        a = a.astype(dtype)
        return jnp.pad(a, ((0, rows - a.shape[0]), (0, cols - a.shape[1])))

    w1p = pad2(w1, K, H_pad, jnp.bfloat16)       # (K, 128)
    w2p = pad2(w2, H_pad, H_pad, jnp.bfloat16)   # (128, 128)
    w3p = pad2(w3, H_pad, N, jnp.bfloat16)       # (128, N)  -- logical output width
    b1p = pad2(b1, 1, H_pad, jnp.float32)
    b2p = pad2(b2, 1, H_pad, jnp.float32)
    b3p = b3.astype(jnp.float32).reshape(1, N)

    # Weights/biases: constant index_map -> DMA'd once, VMEM-resident across the grid.
    resident = lambda r, c: pl.BlockSpec((r, c), lambda i: (0, 0))

    out = pl.pallas_call(
        mlp_kernel,
        out_shape=jax.ShapeDtypeStruct((B_pad, N), jnp.float32),
        grid=(num_tiles,),
        in_specs=[
            pl.BlockSpec((TM, K), lambda i: (i, 0)),     # x: streamed per batch tile
            resident(K, H_pad), resident(1, H_pad),      # layer 1
            resident(H_pad, H_pad), resident(1, H_pad),  # layer 2
            resident(H_pad, N), resident(1, N),          # layer 3
        ],
        out_specs=pl.BlockSpec((TM, N), lambda i: (i, 0)),
        compiler_params=pltpu.CompilerParams(
            # TODO(synk): on v7x switch this axis to pltpu.CORE_PARALLEL (and ensure
            # num_tiles >= 2) to actually split batch tiles across both TensorCores.
            dimension_semantics=("parallel",),
            vmem_limit_bytes=VMEM_BUDGET,
        ),
    )(xp, w1p, b1p, w2p, b2p, w3p, b3p)

    return out if B_pad == B else out[:B]


def init_params(key, input_size, output_size):
    """Deterministic init mimicking torch.nn.Linear's U(-1/sqrt(fan_in), +) init."""
    ks = jax.random.split(key, 6)

    def linear(kw, kb, fan_in, fan_out):
        bound = 1.0 / jnp.sqrt(jnp.float32(fan_in))
        w = jax.random.uniform(kw, (fan_in, fan_out), jnp.float32, -bound, bound)
        b = jax.random.uniform(kb, (1, fan_out), jnp.float32, -bound, bound)
        return w, b

    w1, b1 = linear(ks[0], ks[1], input_size, HIDDEN)
    w2, b2 = linear(ks[2], ks[3], HIDDEN, HIDDEN)
    w3, b3 = linear(ks[4], ks[5], HIDDEN, output_size)
    return (w1, b1, w2, b2, w3, b3)


def reference_forward(x, params):
    w1, b1, w2, b2, w3, b3 = params
    h = jnp.maximum(x @ w1 + b1, 0.0)
    h = jnp.maximum(h @ w2 + b2, 0.0)
    return h @ w3 + b3


if __name__ == "__main__":
    batch, input_size, output_size = 2, 16, 8
    key = jax.random.PRNGKey(0)
    k_x, k_p = jax.random.split(key)

    x = jax.random.normal(k_x, (batch, input_size), jnp.float32)
    params = init_params(k_p, input_size, output_size)

    out = network_forward(x, params)
    jax.block_until_ready(out)

    ref = reference_forward(x, params)
    assert out.shape == (batch, output_size)
    # bf16 MXU operands with fp32 accumulation vs. a pure-fp32 reference.
    assert jnp.allclose(out, ref, atol=5e-2, rtol=5e-2)

    print("KERNEL_OK")
</pallas_src>

<mosaic_0001>
module attributes {stable_mosaic.version = 11 : i64} {
  func.func @mlp_kernel(%arg0: i32, %arg1: memref<8x16xf32, #tpu.memory_space<vmem>>, %arg2: memref<16x128xbf16, #tpu.memory_space<vmem>>, %arg3: memref<1x128xf32, #tpu.memory_space<vmem>>, %arg4: memref<128x128xbf16, #tpu.memory_space<vmem>>, %arg5: memref<1x128xf32, #tpu.memory_space<vmem>>, %arg6: memref<128x8xbf16, #tpu.memory_space<vmem>>, %arg7: memref<1x8xf32, #tpu.memory_space<vmem>>, %arg8: memref<8x8xf32, #tpu.memory_space<vmem>>) attributes {dimension_semantics = [#tpu.dimension_semantics<parallel>], iteration_bounds = array<i64: 1>, scalar_prefetch = 0 : i64, scratch_operands = 0 : i64, tpu.core_type = #tpu.core_type<tc>, window_params = [{transform_indices = @transform_0, window_bounds = array<i64: 8, 16>}, {pipeline_mode = #tpu.pipeline_mode<synchronous>, transform_indices = @transform_1, window_bounds = array<i64: 16, 128>}, {pipeline_mode = #tpu.pipeline_mode<synchronous>, transform_indices = @transform_2, window_bounds = array<i64: 1, 128>}, {pipeline_mode = #tpu.pipeline_mode<synchronous>, transform_indices = @transform_3, window_bounds = array<i64: 128, 128>}, {pipeline_mode = #tpu.pipeline_mode<synchronous>, transform_indices = @transform_4, window_bounds = array<i64: 1, 128>}, {pipeline_mode = #tpu.pipeline_mode<synchronous>, transform_indices = @transform_5, window_bounds = array<i64: 128, 8>}, {pipeline_mode = #tpu.pipeline_mode<synchronous>, transform_indices = @transform_6, window_bounds = array<i64: 1, 8>}, {transform_indices = @transform_7, window_bounds = array<i64: 8, 8>}]} {
    %c0 = arith.constant 0 : index
    %c0_0 = arith.constant 0 : index
    %0 = vector.load %arg1[%c0, %c0_0] : memref<8x16xf32, #tpu.memory_space<vmem>>, vector<8x16xf32>
    %1 = arith.truncf %0 : vector<8x16xf32> to vector<8x16xbf16>
    %c0_1 = arith.constant 0 : index
    %c0_2 = arith.constant 0 : index
    %2 = vector.load %arg2[%c0_1, %c0_2] : memref<16x128xbf16, #tpu.memory_space<vmem>>, vector<16x128xbf16>
    %cst = arith.constant dense<0.000000e+00> : vector<8x128xf32>
    %3 = tpu.matmul %1, %2, %cst {dimension_numbers = #tpu.dot_dimension_numbers<[1], [0], [0], [1], [0, 0, 1, 1], [], []>} : vector<8x16xbf16>, vector<16x128xbf16>, vector<8x128xf32> -> vector<8x128xf32>
    %c0_3 = arith.constant 0 : index
    %c0_4 = arith.constant 0 : index
    %4 = vector.load %arg3[%c0_3, %c0_4] : memref<1x128xf32, #tpu.memory_space<vmem>>, vector<1x128xf32>
    %5 = vector.broadcast %4 : vector<1x128xf32> to vector<8x128xf32>
    %6 = arith.addf %3, %5 : vector<8x128xf32>
    %cst_5 = arith.constant 0.000000e+00 : f32
    %7 = vector.broadcast %cst_5 : f32 to vector<8x128xf32>
    %8 = arith.maximumf %6, %7 : vector<8x128xf32>
    %9 = arith.truncf %8 : vector<8x128xf32> to vector<8x128xbf16>
    %c0_6 = arith.constant 0 : index
    %c0_7 = arith.constant 0 : index
    %10 = vector.load %arg4[%c0_6, %c0_7] : memref<128x128xbf16, #tpu.memory_space<vmem>>, vector<128x128xbf16>
    %cst_8 = arith.constant dense<0.000000e+00> : vector<8x128xf32>
    %11 = tpu.matmul %9, %10, %cst_8 {dimension_numbers = #tpu.dot_dimension_numbers<[1], [0], [0], [1], [0, 0, 1, 1], [], []>} : vector<8x128xbf16>, vector<128x128xbf16>, vector<8x128xf32> -> vector<8x128xf32>
    %c0_9 = arith.constant 0 : index
    %c0_10 = arith.constant 0 : index
    %12 = vector.load %arg5[%c0_9, %c0_10] : memref<1x128xf32, #tpu.memory_space<vmem>>, vector<1x128xf32>
    %13 = vector.broadcast %12 : vector<1x128xf32> to vector<8x128xf32>
    %14 = arith.addf %11, %13 : vector<8x128xf32>
    %cst_11 = arith.constant 0.000000e+00 : f32
    %15 = vector.broadcast %cst_11 : f32 to vector<8x128xf32>
    %16 = arith.maximumf %14, %15 : vector<8x128xf32>
    %17 = arith.truncf %16 : vector<8x128xf32> to vector<8x128xbf16>
    %c0_12 = arith.constant 0 : index
    %c0_13 = arith.constant 0 : index
    %18 = vector.load %arg6[%c0_12, %c0_13] : memref<128x8xbf16, #tpu.memory_space<vmem>>, vector<128x8xbf16>
    %cst_14 = arith.constant dense<0.000000e+00> : vector<8x8xf32>
    %19 = tpu.matmul %17, %18, %cst_14 {dimension_numbers = #tpu.dot_dimension_numbers<[1], [0], [0], [1], [0, 0, 1, 1], [], []>} : vector<8x128xbf16>, vector<128x8xbf16>, vector<8x8xf32> -> vector<8x8xf32>
    %c0_15 = arith.constant 0 : index
    %c0_16 = arith.constant 0 : index
    %20 = vector.load %arg7[%c0_15, %c0_16] : memref<1x8xf32, #tpu.memory_space<vmem>>, vector<1x8xf32>
    %21 = vector.broadcast %20 : vector<1x8xf32> to vector<8x8xf32>
    %22 = arith.addf %19, %21 : vector<8x8xf32>
    %c0_17 = arith.constant 0 : index
    %c0_18 = arith.constant 0 : index
    %23 = vector.load %arg8[%c0_17, %c0_18] : memref<8x8xf32, #tpu.memory_space<vmem>>, vector<8x8xf32>
    tpu.vector_store %arg8[%c0_17, %c0_18], %22 {strides = array<i32>} : memref<8x8xf32, #tpu.memory_space<vmem>>, vector<8x8xf32>,
    return
  }
  func.func @transform_0(%arg0: i32) -> (i32, i32) {
    %c0_i32 = arith.constant 0 : i32
    %c0_i32_0 = arith.constant 0 : i32
    return %arg0, %c0_i32 : i32, i32
  }
  func.func @transform_1(%arg0: i32) -> (i32, i32) {
    %c0_i32 = arith.constant 0 : i32
    %c0_i32_0 = arith.constant 0 : i32
    %c0_i32_1 = arith.constant 0 : i32
    return %c0_i32, %c0_i32_0 : i32, i32
  }
  func.func @transform_2(%arg0: i32) -> (i32, i32) {
    %c0_i32 = arith.constant 0 : i32
    %c0_i32_0 = arith.constant 0 : i32
    %c0_i32_1 = arith.constant 0 : i32
    return %c0_i32, %c0_i32_0 : i32, i32
  }
  func.func @transform_3(%arg0: i32) -> (i32, i32) {
    %c0_i32 = arith.constant 0 : i32
    %c0_i32_0 = arith.constant 0 : i32
    %c0_i32_1 = arith.constant 0 : i32
    return %c0_i32, %c0_i32_0 : i32, i32
  }
  func.func @transform_4(%arg0: i32) -> (i32, i32) {
    %c0_i32 = arith.constant 0 : i32
    %c0_i32_0 = arith.constant 0 : i32
    %c0_i32_1 = arith.constant 0 : i32
    return %c0_i32, %c0_i32_0 : i32, i32
  }
  func.func @transform_5(%arg0: i32) -> (i32, i32) {
    %c0_i32 = arith.constant 0 : i32
    %c0_i32_0 = arith.constant 0 : i32
    %c0_i32_1 = arith.constant 0 : i32
    return %c0_i32, %c0_i32_0 : i32, i32
  }
  func.func @transform_6(%arg0: i32) -> (i32, i32) {
    %c0_i32 = arith.constant 0 : i32
    %c0_i32_0 = arith.constant 0 : i32
    %c0_i32_1 = arith.constant 0 : i32
    return %c0_i32, %c0_i32_0 : i32, i32
  }
  func.func @transform_7(%arg0: i32) -> (i32, i32) {
    %c0_i32 = arith.constant 0 : i32
    %c0_i32_0 = arith.constant 0 : i32
    return %arg0, %c0_i32 : i32, i32
  }
}

</mosaic_0001>

<llo_original>
// kernel: network_forward.1
$region0: #{network_forward.1}
  #allocation0 [shape = 'u32[]', space=smem, size = 0x4, offset = 0x4, fixed_abs, tag = 'smem constant byte address 0x4 - core index']
  #allocation1 [shape = 'u32[72,128]{1,0:T(1,128)}', space=vmem, size = 0x9000, scoped, tag = 'internal scratch']
  %s0 = inlined_call_operand.vmem [shape: f32[8,16], index: 0, kind: input, shape index: {}]
  %s1 = inlined_call_operand.vmem [shape: bf16[16,128], index: 1, kind: input, shape index: {}]
  %s2 = inlined_call_operand.vmem [shape: f32[1,128], index: 2, kind: input, shape index: {}]
  %s3 = inlined_call_operand.vmem [shape: bf16[128,128], index: 3, kind: input, shape index: {}]
  %s4 = inlined_call_operand.vmem [shape: f32[1,128], index: 4, kind: input, shape index: {}]
  %s5 = inlined_call_operand.vmem [shape: bf16[128,8], index: 5, kind: input, shape index: {}]
  %s6 = inlined_call_operand.vmem [shape: f32[1,8], index: 6, kind: input, shape index: {}]
  %s7 = inlined_call_operand.vmem [shape: f32[8,8], index: 7, kind: output, shape index: {}]
  %s8 = sld [smem:[#allocation0]]
  $region38: #{network_forward.1} parent=0
    _
  %s10 = ssub.s32 1, %s8
  %s11 = scalar_select 0, %s10, %s8
  // Predicated region
  $region2: #{network_forward.1} parent=0 // pred_check
    _
  $region3: #{network_forward.1} parent=0 // pred_check_branch
    %13 = sbr.rel (0) target = $region5
  $region4: #{network_forward.1} parent=0 // pred_region
    _
  $region5: #{network_forward.1} parent=0 // pred_fallthru
    _
  // Predicated region
  $region6: #{network_forward.1} parent=0 // pred_check
    _
  $region7: #{network_forward.1} parent=0 // pred_check_branch
    %15 = sbr.rel (0) target = $region9
  $region8: #{network_forward.1} parent=0 // pred_region
    _
  $region9: #{network_forward.1} parent=0 // pred_fallthru
    _
  // Predicated region
  $region10: #{network_forward.1} parent=0 // pred_check
    _
  $region11: #{network_forward.1} parent=0 // pred_check_branch
    %17 = sbr.rel (0) target = $region13
  $region12: #{network_forward.1} parent=0 // pred_region
    _
  $region13: #{network_forward.1} parent=0 // pred_fallthru
    _
  // Predicated region
  $region14: #{network_forward.1} parent=0 // pred_check
    _
  $region15: #{network_forward.1} parent=0 // pred_check_branch
    %19 = sbr.rel (0) target = $region17
  $region16: #{network_forward.1} parent=0 // pred_region
    _
  $region17: #{network_forward.1} parent=0 // pred_fallthru
    _
  // Predicated region
  $region18: #{network_forward.1} parent=0 // pred_check
    _
  $region19: #{network_forward.1} parent=0 // pred_check_branch
    %21 = sbr.rel (0) target = $region21
  $region20: #{network_forward.1} parent=0 // pred_region
    _
  $region21: #{network_forward.1} parent=0 // pred_fallthru
    _
  // Predicated region
  $region22: #{network_forward.1} parent=0 // pred_check
    _
  $region23: #{network_forward.1} parent=0 // pred_check_branch
    %23 = sbr.rel (0) target = $region25
  $region24: #{network_forward.1} parent=0 // pred_region
    _
  $region25: #{network_forward.1} parent=0 // pred_fallthru
    _
  // Predicated region
  $region26: #{network_forward.1} parent=0 // pred_check
    _
  $region27: #{network_forward.1} parent=0 // pred_check_branch
    %25 = sbr.rel (0) target = $region29
  $region28: #{network_forward.1} parent=0 // pred_region
    _
  $region29: #{network_forward.1} parent=0 // pred_fallthru
    _
  %v27 = vld [vmem:[%s0] sm:$0xff]
  %v28 = vpack.c.bf16 %v27, %v27
  %v29 = vld [vmem:[%s1] sm:$0xf]
  %v30 = vld [vmem:[%s1 + $0x4] sm:$0xf]
  %v31 = vld [vmem:[%s2] sm:$0x1]
  %v33 = vperm.slane %v31, 0
  %v37 = vunpack.c.l.b16 %v29
  %v38 = vunpack.c.l.b16 %v30
  %v39 = vpack.c.b16 %v38, %v37
  %vm41 = vcmask 130048
  %v43 = vsel %vm41, %v28, 0
  %45 = vmatpush.bf16.msra.mxu0 0
  %46 = vmatpush.bf16.msra.mxu0 0
  %47 = vmatpush.bf16.msra.mxu0 0
  %48 = vmatpush.bf16.msra.mxu0 0
  %49 = vmatpush.bf16.msra.mxu0 0
  %50 = vmatpush.bf16.msra.mxu0 0
  %51 = vmatpush.bf16.msra.mxu0 0
  %52 = vmatpush.bf16.msra.mxu0 %v39
  %53 = vmatmul.bf16.gmra.mxu0 %v43
  %v54 = vpop.f32.mrf.mxu0
  %v55 = vadd.f32 %v33, %v54
  %v56 = vpop.f32.mrf.mxu0
  %57 = vdwg.mxu0
  %v58 = vmax.f32 %v55, 0.0
  %v59 = vpack.c.bf16 %v58, %v58
  %v60 = vld [vmem:[%s3] sm:$0xf]
  %v61 = vld [vmem:[%s3 + $0x4] sm:$0xf]
  %v62 = vld [vmem:[%s3 + $0x8] sm:$0xf]
  %v63 = vld [vmem:[%s3 + $0xc] sm:$0xf]
  %v64 = vld [vmem:[%s3 + $0x10] sm:$0xf]
  %v65 = vld [vmem:[%s3 + $0x14] sm:$0xf]
  %v66 = vld [vmem:[%s3 + $0x18] sm:$0xf]
  %v67 = vld [vmem:[%s3 + $0x1c] sm:$0xf]
  %v68 = vld [vmem:[%s3 + $0x20] sm:$0xf]
  %v69 = vld [vmem:[%s3 + $0x24] sm:$0xf]
  %v70 = vld [vmem:[%s3 + $0x28] sm:$0xf]
  %v71 = vld [vmem:[%s3 + $0x2c] sm:$0xf]
  %v72 = vld [vmem:[%s3 + $0x30] sm:$0xf]
  %v73 = vld [vmem:[%s3 + $0x34] sm:$0xf]
  %v74 = vld [vmem:[%s3 + $0x38] sm:$0xf]
  %v75 = vld [vmem:[%s3 + $0x3c] sm:$0xf]
  %v76 = vld [vmem:[%s4] sm:$0x1]
  %v78 = vperm.slane %v76, 0
  %v96 = vunpack.c.l.b16 %v60
  %v97 = vunpack.c.l.b16 %v61
  %v98 = vunpack.c.l.b16 %v62
  %v99 = vunpack.c.l.b16 %v63
  %v100 = vunpack.c.l.b16 %v64
  %v101 = vunpack.c.l.b16 %v65
  %v102 = vunpack.c.l.b16 %v66
  %v103 = vunpack.c.l.b16 %v67
  %v104 = vunpack.c.l.b16 %v68
  %v105 = vunpack.c.l.b16 %v69
  %v106 = vunpack.c.l.b16 %v70
  %v107 = vunpack.c.l.b16 %v71
  %v108 = vunpack.c.l.b16 %v72
  %v109 = vunpack.c.l.b16 %v73
  %v110 = vunpack.c.l.b16 %v74
  %v111 = vunpack.c.l.b16 %v75
  %v112 = vpack.c.b16 %v97, %v96
  %v113 = vpack.c.b16 %v99, %v98
  %v114 = vpack.c.b16 %v101, %v100
  %v115 = vpack.c.b16 %v103, %v102
  %v116 = vpack.c.b16 %v105, %v104
  %v117 = vpack.c.b16 %v107, %v106
  %v118 = vpack.c.b16 %v109, %v108
  %v119 = vpack.c.b16 %v111, %v110
  %128 = vmatpush.bf16.msra.mxu0 %v119
  %129 = vmatpush.bf16.msra.mxu0 %v118
  %130 = vmatpush.bf16.msra.mxu0 %v117
  %131 = vmatpush.bf16.msra.mxu0 %v116
  %132 = vmatpush.bf16.msra.mxu0 %v115
  %133 = vmatpush.bf16.msra.mxu0 %v114
  %134 = vmatpush.bf16.msra.mxu0 %v113
  %135 = vmatpush.bf16.msra.mxu0 %v112
  %136 = vmatmul.bf16.gmra.mxu0 %v59
  %v137 = vpop.f32.mrf.mxu0
  %v138 = vadd.f32 %v78, %v137
  %v139 = vpop.f32.mrf.mxu0
  %140 = vdwg.mxu0
  %v141 = vmax.f32 %v138, 0.0
  %v142 = vpack.c.bf16 %v141, %v141
  %v143 = vld [vmem:[%s5] sm:$0xf]
  %v144 = vld [vmem:[%s5 + $0x4] sm:$0xf]
  %v145 = vld [vmem:[%s5 + $0x8] sm:$0xf]
  %v146 = vld [vmem:[%s5 + $0xc] sm:$0xf]
  %v147 = vld [vmem:[%s5 + $0x10] sm:$0xf]
  %v148 = vld [vmem:[%s5 + $0x14] sm:$0xf]
  %v149 = vld [vmem:[%s5 + $0x18] sm:$0xf]
  %v150 = vld [vmem:[%s5 + $0x1c] sm:$0xf]
  %v151 = vld [vmem:[%s5 + $0x20] sm:$0xf]
  %v152 = vld [vmem:[%s5 + $0x24] sm:$0xf]
  %v153 = vld [vmem:[%s5 + $0x28] sm:$0xf]
  %v154 = vld [vmem:[%s5 + $0x2c] sm:$0xf]
  %v155 = vld [vmem:[%s5 + $0x30] sm:$0xf]
  %v156 = vld [vmem:[%s5 + $0x34] sm:$0xf]
  %v157 = vld [vmem:[%s5 + $0x38] sm:$0xf]
  %v158 = vld [vmem:[%s5 + $0x3c] sm:$0xf]
  %v159 = vld [vmem:[%s6] sm:$0x1]
  %v161 = vperm.slane %v159, 0
  %v179 = vunpack.c.l.b16 %v143
  %v180 = vunpack.c.l.b16 %v144
  %v181 = vunpack.c.l.b16 %v145
  %v182 = vunpack.c.l.b16 %v146
  %v183 = vunpack.c.l.b16 %v147
  %v184 = vunpack.c.l.b16 %v148
  %v185 = vunpack.c.l.b16 %v149
  %v186 = vunpack.c.l.b16 %v150
  %v187 = vunpack.c.l.b16 %v151
  %v188 = vunpack.c.l.b16 %v152
  %v189 = vunpack.c.l.b16 %v153
  %v190 = vunpack.c.l.b16 %v154
  %v191 = vunpack.c.l.b16 %v155
  %v192 = vunpack.c.l.b16 %v156
  %v193 = vunpack.c.l.b16 %v157
  %v194 = vunpack.c.l.b16 %v158
  %v195 = vpack.c.b16 %v180, %v179
  %v196 = vpack.c.b16 %v182, %v181
  %v197 = vpack.c.b16 %v184, %v183
  %v198 = vpack.c.b16 %v186, %v185
  %v199 = vpack.c.b16 %v188, %v187
  %v200 = vpack.c.b16 %v190, %v189
  %v201 = vpack.c.b16 %v192, %v191
  %v202 = vpack.c.b16 %v194, %v193
  %211 = vmatpush.bf16.msra.mxu0 %v202
  %212 = vmatpush.bf16.msra.mxu0 %v201
  %213 = vmatpush.bf16.msra.mxu0 %v200
  %214 = vmatpush.bf16.msra.mxu0 %v199
  %215 = vmatpush.bf16.msra.mxu0 %v198
  %216 = vmatpush.bf16.msra.mxu0 %v197
  %217 = vmatpush.bf16.msra.mxu0 %v196
  %218 = vmatpush.bf16.msra.mxu0 %v195
  %219 = vmatmul.bf16.gmra.mxu0 %v142
  %v220 = vpop.f32.mrf.mxu0
  %v221 = vadd.f32 %v161, %v220
  %v222 = vpop.f32.mrf.mxu0
  %223 = vdwg.mxu0
  %vm224 = vcmask 64512
  %225 = vst.msk [vmem:[%s7] sm:$0xff] %vm224, %v221
  // Predicated region
  $region30: #{network_forward.1} parent=0 // pred_check
    _
  $region31: #{network_forward.1} parent=0 // pred_check_branch
    %227 = sbr.rel (0) target = $region33
  $region32: #{network_forward.1} parent=0 // pred_region
    _
  $region33: #{network_forward.1} parent=0 // pred_fallthru
    _
  // Predicated region
  $region34: #{network_forward.1} parent=0 // pred_check
    _
  $region35: #{network_forward.1} parent=0 // pred_check_branch
    %229 = sbr.rel (0) target = $region37
  $region36: #{network_forward.1} parent=0 // pred_region
    _
  $region37: #{network_forward.1} parent=0 // pred_fallthru
    _

</llo_original>
